<compile_context>
chip_gen: v5e
topology: v5e:2x2
jax: 0.10.0
libtpu: 0.0.40
codegen_flags: <defaults>
</compile_context>

<pallas_src>
import functools
import math

import jax
import jax.numpy as jnp
from jax.experimental import pallas as pl
from jax.experimental.pallas import tpu as pltpu


def _round_up(n, m):
    return pl.cdiv(n, m) * m


def _vmem_budget_bytes():
    """75% of physical VMEM (per-generation), with a conservative fallback."""
    cap = 64 * 1024 * 1024  # conservative default (v7x per-TC physical VMEM)
    try:
        info = pltpu.get_tpu_info()
        cap = int(getattr(info, "vmem_capacity_bytes", cap))
    except Exception:
        pass
    return int(cap * 3 // 4)


def _gelu_exact(x):
    # torch.nn.GELU() default: exact erf-based GELU (VALU polynomial).
    return 0.5 * x * (1.0 + jax.lax.erf(x * (1.0 / math.sqrt(2.0))))


def _gelu_tanh(x):
    # tanh approximation: goes to the EUP slot, nearly free when MXU-bound.
    return 0.5 * x * (1.0 + jnp.tanh(0.7978845608028654 * (x + 0.044715 * x * x * x)))


def mlp_kernel(x_ref, w1_ref, b1_ref, w2_ref, b2_ref, o_ref, acc_ref, *,
               gelu, precision):
    k = pl.program_id(1)

    @pl.when(k == 0)
    def _():
        acc_ref[...] = jnp.zeros_like(acc_ref)

    # fc1 chunk: (tm, in_c) @ (in_c, tk) -> f32 accumulate, bias + GELU in f32.
    h = jnp.dot(x_ref[...], w1_ref[...],
                preferred_element_type=jnp.float32, precision=precision)
    h = gelu(h + b1_ref[...])

    # dropout(p=0.0) -> identity

    # fc2 partial product: (tm, tk) @ (tk, out_c), accumulate in f32 scratch.
    acc_ref[...] += jnp.dot(h.astype(w2_ref.dtype), w2_ref[...],
                            preferred_element_type=jnp.float32,
                            precision=precision)

    @pl.when(k == pl.num_programs(1) - 1)
    def _():
        # bias in f32, then cast once to the output dtype.
        o_ref[...] = (acc_ref[...] + b2_ref[...]).astype(o_ref.dtype)
        # dropout(p=0.0) -> identity


def mlp_pallas(x, w1, b1, w2, b2, *, tm=512, tk=512,
               compute_dtype=jnp.bfloat16, out_dtype=None,
               approximate_gelu=True, precision=None,
               vmem_limit_bytes=None):
    """x: (N, S, in_c). w1: (in_c, hidden), b1: (hidden,),
    w2: (hidden, out_c), b2: (out_c,). Returns (N, S, out_c)."""
    N, S, in_c = x.shape
    hidden = w1.shape[1]
    out_c = w2.shape[1]
    if out_dtype is None:
        out_dtype = x.dtype
    M = N * S

    cd = jnp.dtype(compute_dtype).itemsize
    od = jnp.dtype(out_dtype).itemsize

    # f32 compute path: use HIGHEST precision so parity with torch f32 holds.
    if precision is None and jnp.dtype(compute_dtype) == jnp.dtype(jnp.float32):
        precision = jax.lax.Precision.HIGHEST

    # --- lane-dense padded dims ------------------------------------------------
    in_c_pad = int(_round_up(in_c, 128))
    out_c_pad = int(_round_up(out_c, 128))
    hidden_128 = int(_round_up(hidden, 128))

    # row tile: multiple of 16 (bf16 packs two rows per sublane), capped by M.
    tm = int(min(tm, _round_up(M, 16)))
    tm = int(_round_up(tm, 16))
    M_pad = int(_round_up(M, tm))

    # --- per-generation VMEM budget & weight-residency decision ----------------
    budget = _vmem_budget_bytes() if vmem_limit_bytes is None else int(vmem_limit_bytes)

    def vmem_need(tm_, tk_, n_wbuf):
        return (2 * tm_ * in_c_pad * cd                         # x tile (x2 buffers)
                + 2 * tm_ * out_c_pad * od                      # out tile (x2 buffers)
                + tm_ * out_c_pad * 4                           # f32 accumulator
                + n_wbuf * (in_c_pad * tk_ + tk_ * out_c_pad) * cd  # w1/w2 buffers
                + n_wbuf * (tk_ + out_c_pad) * 4)               # b1 chunk + b2 (f32)

    resident = vmem_need(tm, hidden_128, 2) <= budget
    if resident:
        # Weights fully resident: single K step -> constant w1/w2 block indices,
        # Pallas fetches them from HBM exactly once across all row tiles.
        tk = hidden_128
        hidden_pad = hidden_128
    else:
        # Fallback: K-stream weight chunks (triple-buffered), shrink until it fits.
        tk = int(min(_round_up(tk, 128), hidden_128))
        while tk > 128 and vmem_need(tm, tk, 3) > budget:
            tk = int(_round_up(tk // 2, 128))
        while tm > 16 and vmem_need(tm, tk, 3) > budget:
            tm = int(_round_up(tm // 2, 16))
            M_pad = int(_round_up(M, tm))
        hidden_pad = int(_round_up(hidden, tk))

    # --- cast + zero-pad operands in the wrapper --------------------------------
    # zero padding is exact: padded hidden cols give gelu(0)=0 -> contribute 0.
    x2 = jnp.pad(x.reshape(M, in_c).astype(compute_dtype),
                 ((0, M_pad - M), (0, in_c_pad - in_c)))
    w1p = jnp.pad(w1.astype(compute_dtype),
                  ((0, in_c_pad - in_c), (0, hidden_pad - hidden)))
    b1p = jnp.pad(b1.astype(jnp.float32), (0, hidden_pad - hidden)).reshape(1, hidden_pad)
    w2p = jnp.pad(w2.astype(compute_dtype),
                  ((0, hidden_pad - hidden), (0, out_c_pad - out_c)))
    b2p = jnp.pad(b2.astype(jnp.float32), (0, out_c_pad - out_c)).reshape(1, out_c_pad)

    grid = (M_pad // tm, hidden_pad // tk)
    n_row_tiles = grid[0]

    # --- BlockSpecs -------------------------------------------------------------
    if resident:
        w1_spec = pl.BlockSpec((in_c_pad, tk), lambda i, k: (0, k))
        w2_spec = pl.BlockSpec((tk, out_c_pad), lambda i, k: (k, 0))
    else:
        w1_spec = pl.BlockSpec((in_c_pad, tk), lambda i, k: (0, k),
                               pipeline_mode=pl.Buffered(3))
        w2_spec = pl.BlockSpec((tk, out_c_pad), lambda i, k: (k, 0),
                               pipeline_mode=pl.Buffered(3))
    b1_spec = pl.BlockSpec((1, tk), lambda i, k: (0, k))
    b2_spec = pl.BlockSpec((1, out_c_pad), lambda i, k: (0, 0))

    # --- truthful cost estimate ---------------------------------------------------
    weight_bytes = (in_c_pad * hidden_pad + hidden_pad * out_c_pad) * cd
    if resident:
        w_traffic = weight_bytes + (hidden_pad + out_c_pad) * 4
    else:
        # each row tile re-reads all w1/w2/b1 chunks; b2 block index is constant.
        w_traffic = n_row_tiles * (weight_bytes + hidden_pad * 4) + out_c_pad * 4
    cost = pl.CostEstimate(
        flops=int(2 * M * (in_c * hidden + hidden * out_c)),
        transcendentals=int(M * hidden),
        bytes_accessed=int(M_pad * in_c_pad * cd + w_traffic + M_pad * out_c_pad * od),
    )

    gelu = _gelu_tanh if approximate_gelu else _gelu_exact
    kernel = functools.partial(mlp_kernel, gelu=gelu, precision=precision)

    out = pl.pallas_call(
        kernel,
        out_shape=jax.ShapeDtypeStruct((M_pad, out_c_pad), out_dtype),
        grid_spec=pltpu.PrefetchScalarGridSpec(
            num_scalar_prefetch=0,
            grid=grid,
            in_specs=[
                pl.BlockSpec((tm, in_c_pad), lambda i, k: (i, 0)),   # x row tile
                w1_spec,                                             # w1 (resident / streamed)
                b1_spec,                                             # b1 chunk
                w2_spec,                                             # w2 (resident / streamed)
                b2_spec,                                             # b2 (resident)
            ],
            out_specs=pl.BlockSpec((tm, out_c_pad), lambda i, k: (i, 0)),
            scratch_shapes=[pltpu.VMEM((tm, out_c_pad), jnp.float32)],
        ),
        compiler_params=pltpu.CompilerParams(
            dimension_semantics=("parallel", "arbitrary"),
            vmem_limit_bytes=int(budget),
        ),
        cost_estimate=cost,
    )(x2, w1p, b1p, w2p, b2p)

    return out[:M, :out_c].reshape(N, S, out_c)


def mlp_reference(x, w1, b1, w2, b2):
    h = jax.nn.gelu(jnp.dot(x, w1) + b1, approximate=False)
    return jnp.dot(h, w2) + b2


if __name__ == "__main__":
    # Small shapes consistent with the module: batch=2, seq = num_patches+1 = 16,
    # in_c=32, hidden_c=64, out_c=32.
    N, S, in_c, hidden_c, out_c = 2, 16, 32, 64, 32

    key = jax.random.PRNGKey(0)
    kx, kw1, kb1, kw2, kb2 = jax.random.split(key, 5)

    x = jax.random.normal(kx, (N, S, in_c), dtype=jnp.float32)

    # Deterministic init mirroring nn.Linear's uniform(-1/sqrt(fan_in), +...)
    bound1 = 1.0 / math.sqrt(in_c)
    w1 = jax.random.uniform(kw1, (in_c, hidden_c), jnp.float32, -bound1, bound1)
    b1 = jax.random.uniform(kb1, (hidden_c,), jnp.float32, -bound1, bound1)
    bound2 = 1.0 / math.sqrt(hidden_c)
    w2 = jax.random.uniform(kw2, (hidden_c, out_c), jnp.float32, -bound2, bound2)
    b2 = jax.random.uniform(kb2, (out_c,), jnp.float32, -bound2, bound2)

    ref = mlp_reference(x, w1, b1, w2, b2)

    # (1) exact-parity path: f32 MXU operands at HIGHEST precision + erf GELU.
    out_f32 = jax.block_until_ready(
        mlp_pallas(x, w1, b1, w2, b2,
                   compute_dtype=jnp.float32, approximate_gelu=False))
    assert out_f32.shape == (N, S, out_c)
    assert jnp.allclose(out_f32, ref, atol=1e-5, rtol=1e-5), "f32 mismatch vs reference"

    # (2) fast path (default): bf16 MXU operands, f32 accumulation, tanh GELU,
    #     weights VMEM-resident (K grid = 1 for these shapes).
    out_bf16 = jax.block_until_ready(mlp_pallas(x, w1, b1, w2, b2))
    assert out_bf16.shape == (N, S, out_c)
    assert jnp.allclose(out_bf16, ref, atol=5e-2, rtol=5e-2), "bf16 mismatch vs reference"

    print("KERNEL_OK")
</pallas_src>

<mosaic_0001>
module attributes {stable_mosaic.version = 11 : i64} {
  func.func @mlp_kernel(%arg0: i32, %arg1: i32, %arg2: memref<32x128xf32, #tpu.memory_space<vmem>>, %arg3: memref<128x128xf32, #tpu.memory_space<vmem>>, %arg4: memref<1x128xf32, #tpu.memory_space<vmem>>, %arg5: memref<128x128xf32, #tpu.memory_space<vmem>>, %arg6: memref<1x128xf32, #tpu.memory_space<vmem>>, %arg7: memref<32x128xf32, #tpu.memory_space<vmem>>, %arg8: memref<32x128xf32, #tpu.memory_space<vmem>>) attributes {dimension_semantics = [#tpu.dimension_semantics<parallel>, #tpu.dimension_semantics<arbitrary>], iteration_bounds = array<i64: 1, 1>, scalar_prefetch = 0 : i64, scratch_operands = 1 : i64, tpu.core_type = #tpu.core_type<tc>, window_params = [{transform_indices = @transform_0, window_bounds = array<i64: 32, 128>}, {transform_indices = @transform_1, window_bounds = array<i64: 128, 128>}, {transform_indices = @transform_2, window_bounds = array<i64: 1, 128>}, {transform_indices = @transform_3, window_bounds = array<i64: 128, 128>}, {pipeline_mode = #tpu.pipeline_mode<synchronous>, transform_indices = @transform_4, window_bounds = array<i64: 1, 128>}, {transform_indices = @transform_5, window_bounds = array<i64: 32, 128>}]} {
    %c0_i32 = arith.constant 0 : i32
    %0 = arith.cmpi eq, %arg1, %c0_i32 : i32
    %1 = arith.extui %0 : i1 to i32
    %c0_i32_0 = arith.constant 0 : i32
    %2 = arith.cmpi ne, %1, %c0_i32_0 : i32
    scf.if %2 {
      %cst_18 = arith.constant 0.000000e+00 : f32
      %25 = vector.broadcast %cst_18 : f32 to vector<32x128xf32>
      %c0_19 = arith.constant 0 : index
      %c0_20 = arith.constant 0 : index
      %26 = vector.load %arg8[%c0_19, %c0_20] : memref<32x128xf32, #tpu.memory_space<vmem>>, vector<32x128xf32>
      tpu.vector_store %arg8[%c0_19, %c0_20], %25 {strides = array<i32>} : memref<32x128xf32, #tpu.memory_space<vmem>>, vector<32x128xf32>,
    } else {
    }
    %c0 = arith.constant 0 : index
    %c0_1 = arith.constant 0 : index
    %3 = vector.load %arg2[%c0, %c0_1] : memref<32x128xf32, #tpu.memory_space<vmem>>, vector<32x128xf32>
    %c0_2 = arith.constant 0 : index
    %c0_3 = arith.constant 0 : index
    %4 = vector.load %arg3[%c0_2, %c0_3] : memref<128x128xf32, #tpu.memory_space<vmem>>, vector<128x128xf32>
    %cst = arith.constant dense<0.000000e+00> : vector<32x128xf32>
    %5 = tpu.matmul %3, %4, %cst {dimension_numbers = #tpu.dot_dimension_numbers<[1], [0], [0], [1], [0, 0, 1, 1], [], []>, precision = #tpu.contract_precision<fp32>} : vector<32x128xf32>, vector<128x128xf32>, vector<32x128xf32> -> vector<32x128xf32>
    %c0_4 = arith.constant 0 : index
    %c0_5 = arith.constant 0 : index
    %6 = vector.load %arg4[%c0_4, %c0_5] : memref<1x128xf32, #tpu.memory_space<vmem>>, vector<1x128xf32>
    %7 = vector.broadcast %6 : vector<1x128xf32> to vector<32x128xf32>
    %8 = arith.addf %5, %7 : vector<32x128xf32>
    %cst_6 = arith.constant 5.000000e-01 : f32
    %9 = vector.broadcast %cst_6 : f32 to vector<32x128xf32>
    %10 = arith.mulf %9, %8 : vector<32x128xf32>
    %cst_7 = arith.constant 0.707106769 : f32
    %11 = vector.broadcast %cst_7 : f32 to vector<32x128xf32>
    %12 = arith.mulf %8, %11 : vector<32x128xf32>
    %13 = math.erf %12 : vector<32x128xf32>
    %cst_8 = arith.constant 1.000000e+00 : f32
    %14 = vector.broadcast %cst_8 : f32 to vector<32x128xf32>
    %15 = arith.addf %14, %13 : vector<32x128xf32>
    %16 = arith.mulf %10, %15 : vector<32x128xf32>
    %c0_9 = arith.constant 0 : index
    %c0_10 = arith.constant 0 : index
    %17 = vector.load %arg8[%c0_9, %c0_10] : memref<32x128xf32, #tpu.memory_space<vmem>>, vector<32x128xf32>
    %c0_11 = arith.constant 0 : index
    %c0_12 = arith.constant 0 : index
    %18 = vector.load %arg5[%c0_11, %c0_12] : memref<128x128xf32, #tpu.memory_space<vmem>>, vector<128x128xf32>
    %cst_13 = arith.constant dense<0.000000e+00> : vector<32x128xf32>
    %19 = tpu.matmul %16, %18, %cst_13 {dimension_numbers = #tpu.dot_dimension_numbers<[1], [0], [0], [1], [0, 0, 1, 1], [], []>, precision = #tpu.contract_precision<fp32>} : vector<32x128xf32>, vector<128x128xf32>, vector<32x128xf32> -> vector<32x128xf32>
    %20 = arith.addf %17, %19 : vector<32x128xf32>
    %c0_14 = arith.constant 0 : index
    %c0_15 = arith.constant 0 : index
    %21 = vector.load %arg8[%c0_14, %c0_15] : memref<32x128xf32, #tpu.memory_space<vmem>>, vector<32x128xf32>
    tpu.vector_store %arg8[%c0_14, %c0_15], %20 {strides = array<i32>} : memref<32x128xf32, #tpu.memory_space<vmem>>, vector<32x128xf32>,
    %c0_i32_16 = arith.constant 0 : i32
    %22 = arith.cmpi eq, %arg1, %c0_i32_16 : i32
    %23 = arith.extui %22 : i1 to i32
    %c0_i32_17 = arith.constant 0 : i32
    %24 = arith.cmpi ne, %23, %c0_i32_17 : i32
    scf.if %24 {
      %c0_18 = arith.constant 0 : index
      %c0_19 = arith.constant 0 : index
      %25 = vector.load %arg8[%c0_18, %c0_19] : memref<32x128xf32, #tpu.memory_space<vmem>>, vector<32x128xf32>
      %c0_20 = arith.constant 0 : index
      %c0_21 = arith.constant 0 : index
      %26 = vector.load %arg6[%c0_20, %c0_21] : memref<1x128xf32, #tpu.memory_space<vmem>>, vector<1x128xf32>
      %27 = vector.broadcast %26 : vector<1x128xf32> to vector<32x128xf32>
      %28 = arith.addf %25, %27 : vector<32x128xf32>
      %c0_22 = arith.constant 0 : index
      %c0_23 = arith.constant 0 : index
      %29 = vector.load %arg7[%c0_22, %c0_23] : memref<32x128xf32, #tpu.memory_space<vmem>>, vector<32x128xf32>
      tpu.vector_store %arg7[%c0_22, %c0_23], %28 {strides = array<i32>} : memref<32x128xf32, #tpu.memory_space<vmem>>, vector<32x128xf32>,
    } else {
    }
    return
  }
  func.func @transform_0(%arg0: i32, %arg1: i32) -> (i32, i32) {
    %c0_i32 = arith.constant 0 : i32
    %c0_i32_0 = arith.constant 0 : i32
    return %arg0, %c0_i32 : i32, i32
  }
  func.func @transform_1(%arg0: i32, %arg1: i32) -> (i32, i32) {
    %c0_i32 = arith.constant 0 : i32
    %c0_i32_0 = arith.constant 0 : i32
    return %c0_i32, %arg1 : i32, i32
  }
  func.func @transform_2(%arg0: i32, %arg1: i32) -> (i32, i32) {
    %c0_i32 = arith.constant 0 : i32
    %c0_i32_0 = arith.constant 0 : i32
    return %c0_i32, %arg1 : i32, i32
  }
  func.func @transform_3(%arg0: i32, %arg1: i32) -> (i32, i32) {
    %c0_i32 = arith.constant 0 : i32
    %c0_i32_0 = arith.constant 0 : i32
    return %arg1, %c0_i32 : i32, i32
  }
  func.func @transform_4(%arg0: i32, %arg1: i32) -> (i32, i32) {
    %c0_i32 = arith.constant 0 : i32
    %c0_i32_0 = arith.constant 0 : i32
    %c0_i32_1 = arith.constant 0 : i32
    return %c0_i32, %c0_i32_0 : i32, i32
  }
  func.func @transform_5(%arg0: i32, %arg1: i32) -> (i32, i32) {
    %c0_i32 = arith.constant 0 : i32
    %c0_i32_0 = arith.constant 0 : i32
    return %arg0, %c0_i32 : i32, i32
  }
}

</mosaic_0001>

<llo_original>
// kernel: tpu_custom_call.1
$region0: #{tpu_custom_call.1}
  #allocation0 [shape = 'u32[]', space=smem, size = 0x4, offset = 0x4, fixed_abs, tag = 'smem constant byte address 0x4 - core index']
  #allocation1 [shape = 'u32[72,128]{1,0:T(1,128)}', space=vmem, size = 0x9000, scoped, tag = 'internal scratch']
  #allocation2 [shape = 'f32[32,128]{1,0:T(8,128)}', space=vmem, size = 0x4000, scoped, tag = 'scratch operand']
  %s0 = inlined_call_operand.hbm [shape: f32[32,128], index: 0, kind: input, shape index: {}]
  %s1 = inlined_call_operand.hbm [shape: f32[128,128], index: 1, kind: input, shape index: {}]
  %s2 = inlined_call_operand.vmem [shape: f32[1,128], index: 2, kind: input, shape index: {}]
  %s3 = inlined_call_operand.hbm [shape: f32[128,128], index: 3, kind: input, shape index: {}]
  %s4 = inlined_call_operand.vmem [shape: f32[1,128], index: 4, kind: input, shape index: {}]
  %s5 = inlined_call_operand.hbm [shape: f32[32,128], index: 5, kind: output, shape index: {}]
  %s6 = sld [smem:[#allocation0]]
  $region50: #{tpu_custom_call.1} parent=0
    _
  %s8 = ssub.s32 1, %s6
  %s9 = scalar_select 0, %s8, %s6
  $region1: #{tpu_custom_call.1} parent=0
    #allocation3 [shape = 'u8[16384]{0}', space=vmem, size = 0x4000, scoped, tag = 'input window, operand 0, single buffered']
    #allocation4 [shape = 's32[1]{0}', space=sflag, size = 0x4, scoped, tag = 'scoped memory for tpu_custom_call.1']
    #allocation5 [shape = 's32[1]{0}', space=sflag, size = 0x4, scoped, tag = 'scoped memory for tpu_custom_call.1']
    #allocation6 [shape = 'u8[65536]{0}', space=vmem, size = 0x10000, scoped, tag = 'input window, operand 1, single buffered']
    #allocation7 [shape = 's32[1]{0}', space=sflag, size = 0x4, scoped, tag = 'scoped memory for tpu_custom_call.1']
    #allocation8 [shape = 'u8[65536]{0}', space=vmem, size = 0x10000, scoped, tag = 'input window, operand 3, single buffered']
    #allocation9 [shape = 'u8[16384]{0}', space=vmem, size = 0x4000, scoped, tag = 'output window, operand 0, single buffered']
    %10 = vsyncpa [#allocation4], 0
    %11 = vsyncpa [#allocation7], 0
    %12 = vsyncpa [#allocation5], 0
    // Predicated region
    $region2: #{tpu_custom_call.1} parent=1 // pred_check
      _
    $region3: #{tpu_custom_call.1} parent=1 // pred_check_branch
      %14 = sbr.rel (0) target = $region5
    $region4: #{tpu_custom_call.1} parent=1 // pred_region
      %16 = vsyncadd [#allocation4], 0
      %s17 = sshll.u32 %s0, 4
      %s18 = int_to_ptr.hbm [resolvable:$true] %s17
      %s19 = sshll.u32 [#allocation3], 4
      %s20 = int_to_ptr.vmem [resolvable:$true] %s19
      %25 = dma.hbm_to_vmem [thread:$0]  %s18, 512, %s20, [#allocation4], 128, 128, 8
    $region5: #{tpu_custom_call.1} parent=1 // pred_fallthru
      _
    // Predicated region
    $region6: #{tpu_custom_call.1} parent=1 // pred_check
      _
    $region7: #{tpu_custom_call.1} parent=1 // pred_check_branch
      %27 = sbr.rel (0) target = $region9
    $region8: #{tpu_custom_call.1} parent=1 // pred_region
      %29 = vsyncadd [#allocation7], 0
      %s30 = sshll.u32 %s1, 4
      %s31 = int_to_ptr.hbm [resolvable:$true] %s30
      %s32 = sshll.u32 [#allocation6], 4
      %s33 = int_to_ptr.vmem [resolvable:$true] %s32
      %38 = dma.hbm_to_vmem [thread:$0]  %s31, 2048, %s33, [#allocation7], 128, 128, 8
    $region9: #{tpu_custom_call.1} parent=1 // pred_fallthru
      _
    // Predicated region
    $region10: #{tpu_custom_call.1} parent=1 // pred_check
      _
    $region11: #{tpu_custom_call.1} parent=1 // pred_check_branch
      %40 = sbr.rel (0) target = $region13
    $region12: #{tpu_custom_call.1} parent=1 // pred_region
      _
    $region13: #{tpu_custom_call.1} parent=1 // pred_fallthru
      _
    // Predicated region
    $region14: #{tpu_custom_call.1} parent=1 // pred_check
      _
    $region15: #{tpu_custom_call.1} parent=1 // pred_check_branch
      %42 = sbr.rel (0) target = $region17
    $region16: #{tpu_custom_call.1} parent=1 // pred_region
      %44 = vsyncadd [#allocation7], 0
      %s45 = sshll.u32 %s3, 4
      %s46 = int_to_ptr.hbm [resolvable:$true] %s45
      %s47 = sshll.u32 [#allocation8], 4
      %s48 = int_to_ptr.vmem [resolvable:$true] %s47
      %53 = dma.hbm_to_vmem [thread:$0]  %s46, 2048, %s48, [#allocation7], 128, 128, 8
    $region17: #{tpu_custom_call.1} parent=1 // pred_fallthru
      _
    // Predicated region
    $region18: #{tpu_custom_call.1} parent=1 // pred_check
      _
    $region19: #{tpu_custom_call.1} parent=1 // pred_check_branch
      %55 = sbr.rel (0) target = $region21
    $region20: #{tpu_custom_call.1} parent=1 // pred_region
      _
    $region21: #{tpu_custom_call.1} parent=1 // pred_fallthru
      _
    // Predicated region
    $region22: #{tpu_custom_call.1} parent=1 // pred_check
      _
    $region23: #{tpu_custom_call.1} parent=1 // pred_check_branch
      %57 = sbr.rel (0) target = $region25
    $region24: #{tpu_custom_call.1} parent=1 // pred_region
      %59 = dma.done [#allocation4], 512
    $region25: #{tpu_custom_call.1} parent=1 // pred_fallthru
      _
    // Predicated region
    $region26: #{tpu_custom_call.1} parent=1 // pred_check
      _
    $region27: #{tpu_custom_call.1} parent=1 // pred_check_branch
      %61 = sbr.rel (0) target = $region29
    $region28: #{tpu_custom_call.1} parent=1 // pred_region
      %63 = dma.done [#allocation7], 2048
    $region29: #{tpu_custom_call.1} parent=1 // pred_fallthru
      _
    // Predicated region
    $region30: #{tpu_custom_call.1} parent=1 // pred_check
      _
    $region31: #{tpu_custom_call.1} parent=1 // pred_check_branch
      %65 = sbr.rel (0) target = $region33
    $region32: #{tpu_custom_call.1} parent=1 // pred_region
      %67 = dma.done [#allocation7], 2048
    $region33: #{tpu_custom_call.1} parent=1 // pred_fallthru
      _
    %p68 = scmp.eq.s32.totalorder 0, 0
    // Predicated region
    $region34: #{tpu_custom_call.1} parent=1 // pred_check
      %p69 = pneg %p68
    $region35: #{tpu_custom_call.1} parent=1 // pred_check_branch
      %71 = sbr.rel (%p69) target = $region37
    $region36: #{tpu_custom_call.1} parent=1 // pred_region
      %72 = vst [vmem:[#allocation2] sm:$0xff] 0.0
      %73 = vst [vmem:[#allocation2 + $0x8] sm:$0xff] 0.0
      %74 = vst [vmem:[#allocation2 + $0x10] sm:$0xff] 0.0
      %75 = vst [vmem:[#allocation2 + $0x18] sm:$0xff] 0.0
    $region37: #{tpu_custom_call.1} parent=1 // pred_fallthru
      _
    %v76 = vld [vmem:[#allocation3] sm:$0xff]
    %v77 = vld [vmem:[#allocation3 + $0x8] sm:$0xff]
    %v78 = vld [vmem:[#allocation3 + $0x10] sm:$0xff]
    %v79 = vld [vmem:[#allocation3 + $0x18] sm:$0xff]
    %v80 = vld [vmem:[#allocation6] sm:$0xff]
    %v81 = vld [vmem:[#allocation6 + $0x8] sm:$0xff]
    %v82 = vld [vmem:[#allocation6 + $0x10] sm:$0xff]
    %v83 = vld [vmem:[#allocation6 + $0x18] sm:$0xff]
    %v84 = vld [vmem:[#allocation6 + $0x20] sm:$0xff]
    %v85 = vld [vmem:[#allocation6 + $0x28] sm:$0xff]
    %v86 = vld [vmem:[#allocation6 + $0x30] sm:$0xff]
    %v87 = vld [vmem:[#allocation6 + $0x38] sm:$0xff]
    %v88 = vld [vmem:[#allocation6 + $0x40] sm:$0xff]
    %v89 = vld [vmem:[#allocation6 + $0x48] sm:$0xff]
    %v90 = vld [vmem:[#allocation6 + $0x50] sm:$0xff]
    %v91 = vld [vmem:[#allocation6 + $0x58] sm:$0xff]
    %v92 = vld [vmem:[#allocation6 + $0x60] sm:$0xff]
    %v93 = vld [vmem:[#allocation6 + $0x68] sm:$0xff]
    %v94 = vld [vmem:[#allocation6 + $0x70] sm:$0xff]
    %v95 = vld [vmem:[#allocation6 + $0x78] sm:$0xff]
    %v96 = vld [vmem:[%s2] sm:$0x1]
    %v98 = vperm.slane %v96, 0
    %v100 = vand.u32 %v95, 4294901760
    %101 = vmatpush.msra.mxu0 %v100
    %v102 = vand.u32 %v94, 4294901760
    %103 = vmatpush.msra.mxu0 %v102
    %v104 = vand.u32 %v93, 4294901760
    %105 = vmatpush.msra.mxu0 %v104
    %v106 = vand.u32 %v92, 4294901760
    %107 = vmatpush.msra.mxu0 %v106
    %v108 = vand.u32 %v91, 4294901760
    %109 = vmatpush.msra.mxu0 %v108
    %v110 = vand.u32 %v90, 4294901760
    %111 = vmatpush.msra.mxu0 %v110
    %v112 = vand.u32 %v89, 4294901760
    %113 = vmatpush.msra.mxu0 %v112
    %v114 = vand.u32 %v88, 4294901760
    %115 = vmatpush.msra.mxu0 %v114
    %v116 = vand.u32 %v87, 4294901760
    %117 = vmatpush.msra.mxu0 %v116
    %v118 = vand.u32 %v86, 4294901760
    %119 = vmatpush.msra.mxu0 %v118
    %v120 = vand.u32 %v85, 4294901760
    %121 = vmatpush.msra.mxu0 %v120
    %v122 = vand.u32 %v84, 4294901760
    %123 = vmatpush.msra.mxu0 %v122
    %v124 = vand.u32 %v83, 4294901760
    %125 = vmatpush.msra.mxu0 %v124
    %v126 = vand.u32 %v82, 4294901760
    %127 = vmatpush.msra.mxu0 %v126
    %v128 = vand.u32 %v81, 4294901760
    %129 = vmatpush.msra.mxu0 %v128
    %v130 = vand.u32 %v80, 4294901760
    %131 = vmatpush.msra.mxu0 %v130
    %v132 = vand.u32 %v76, 4294901760
    %v133 = vsub.f32 %v76, %v132
    %v134 = vand.u32 %v133, 4294901760
    %v135 = vsub.f32 %v133, %v134
    %v136 = vand.u32 %v135, 4294901760
    %137 = vmatmul.f32.gmra.mxu0 %v136
    %v138 = vpop.f32.mrf.mxu0
    %v139 = vadd.f32 %v98, %v138
    %v140 = vand.u32 %v77, 4294901760
    %v141 = vsub.f32 %v77, %v140
    %v142 = vand.u32 %v141, 4294901760
    %v143 = vsub.f32 %v141, %v142
    %v144 = vand.u32 %v143, 4294901760
    %145 = vmatmul.f32.gmra.mxu0 %v144
    %v146 = vpop.f32.mrf.mxu0
    %v147 = vadd.f32 %v98, %v146
    %v148 = vand.u32 %v78, 4294901760
    %v149 = vsub.f32 %v78, %v148
    %v150 = vand.u32 %v149, 4294901760
    %v151 = vsub.f32 %v149, %v150
    %v152 = vand.u32 %v151, 4294901760
    %153 = vmatmul.f32.gmra.mxu0 %v152
    %v154 = vpop.f32.mrf.mxu0
    %v155 = vadd.f32 %v98, %v154
    %v156 = vand.u32 %v79, 4294901760
    %v157 = vsub.f32 %v79, %v156
    %v158 = vand.u32 %v157, 4294901760
    %v159 = vsub.f32 %v157, %v158
    %v160 = vand.u32 %v159, 4294901760
    %161 = vmatmul.f32.gmra.mxu0 %v160
    %v162 = vpop.f32.mrf.mxu0
    %v163 = vadd.f32 %v98, %v162
    %164 = vdwg.mxu0
    %v165 = vand.u32 %v95, 4294901760
    %v166 = vsub.f32 %v95, %v165
    %v167 = vand.u32 %v166, 4294901760
    %v168 = vsub.f32 %v166, %v167
    %v169 = vand.u32 %v168, 4294901760
    %170 = vmatpush.msra.mxu0 %v169
    %v171 = vand.u32 %v94, 4294901760
    %v172 = vsub.f32 %v94, %v171
    %v173 = vand.u32 %v172, 4294901760
    %v174 = vsub.f32 %v172, %v173
    %v175 = vand.u32 %v174, 4294901760
    %176 = vmatpush.msra.mxu0 %v175
    %v177 = vand.u32 %v93, 4294901760
    %v178 = vsub.f32 %v93, %v177
    %v179 = vand.u32 %v178, 4294901760
    %v180 = vsub.f32 %v178, %v179
    %v181 = vand.u32 %v180, 4294901760
    %182 = vmatpush.msra.mxu0 %v181
    %v183 = vand.u32 %v92, 4294901760
    %v184 = vsub.f32 %v92, %v183
    %v185 = vand.u32 %v184, 4294901760
    %v186 = vsub.f32 %v184, %v185
    %v187 = vand.u32 %v186, 4294901760
    %188 = vmatpush.msra.mxu0 %v187
    %v189 = vand.u32 %v91, 4294901760
    %v190 = vsub.f32 %v91, %v189
    %v191 = vand.u32 %v190, 4294901760
    %v192 = vsub.f32 %v190, %v191
    %v193 = vand.u32 %v192, 4294901760
    %194 = vmatpush.msra.mxu0 %v193
    %v195 = vand.u32 %v90, 4294901760
    %v196 = vsub.f32 %v90, %v195
    %v197 = vand.u32 %v196, 4294901760
    %v198 = vsub.f32 %v196, %v197
    %v199 = vand.u32 %v198, 4294901760
    %200 = vmatpush.msra.mxu0 %v199
    %v201 = vand.u32 %v89, 4294901760
    %v202 = vsub.f32 %v89, %v201
    %v203 = vand.u32 %v202, 4294901760
    %v204 = vsub.f32 %v202, %v203
    %v205 = vand.u32 %v204, 4294901760
    %206 = vmatpush.msra.mxu0 %v205
    %v207 = vand.u32 %v88, 4294901760
    %v208 = vsub.f32 %v88, %v207
    %v209 = vand.u32 %v208, 4294901760
    %v210 = vsub.f32 %v208, %v209
    %v211 = vand.u32 %v210, 4294901760
    %212 = vmatpush.msra.mxu0 %v211
    %v213 = vand.u32 %v87, 4294901760
    %v214 = vsub.f32 %v87, %v213
    %v215 = vand.u32 %v214, 4294901760
    %v216 = vsub.f32 %v214, %v215
    %v217 = vand.u32 %v216, 4294901760
    %218 = vmatpush.msra.mxu0 %v217
    %v219 = vand.u32 %v86, 4294901760
    %v220 = vsub.f32 %v86, %v219
    %v221 = vand.u32 %v220, 4294901760
    %v222 = vsub.f32 %v220, %v221
    %v223 = vand.u32 %v222, 4294901760
    %224 = vmatpush.msra.mxu0 %v223
    %v225 = vand.u32 %v85, 4294901760
    %v226 = vsub.f32 %v85, %v225
    %v227 = vand.u32 %v226, 4294901760
    %v228 = vsub.f32 %v226, %v227
    %v229 = vand.u32 %v228, 4294901760
    %230 = vmatpush.msra.mxu0 %v229
    %v231 = vand.u32 %v84, 4294901760
    %v232 = vsub.f32 %v84, %v231
    %v233 = vand.u32 %v232, 4294901760
    %v234 = vsub.f32 %v232, %v233
    %v235 = vand.u32 %v234, 4294901760
    %236 = vmatpush.msra.mxu0 %v235
    %v237 = vand.u32 %v83, 4294901760
    %v238 = vsub.f32 %v83, %v237
    %v239 = vand.u32 %v238, 4294901760
    %v240 = vsub.f32 %v238, %v239
    %v241 = vand.u32 %v240, 4294901760
    %242 = vmatpush.msra.mxu0 %v241
    %v243 = vand.u32 %v82, 4294901760
    %v244 = vsub.f32 %v82, %v243
    %v245 = vand.u32 %v244, 4294901760
    %v246 = vsub.f32 %v244, %v245
    %v247 = vand.u32 %v246, 4294901760
    %248 = vmatpush.msra.mxu0 %v247
    %v249 = vand.u32 %v81, 4294901760
    %v250 = vsub.f32 %v81, %v249
    %v251 = vand.u32 %v250, 4294901760
    %v252 = vsub.f32 %v250, %v251
    %v253 = vand.u32 %v252, 4294901760
    %254 = vmatpush.msra.mxu0 %v253
    %v255 = vand.u32 %v80, 4294901760
    %v256 = vsub.f32 %v80, %v255
    %v257 = vand.u32 %v256, 4294901760
    %v258 = vsub.f32 %v256, %v257
    %v259 = vand.u32 %v258, 4294901760
    %260 = vmatpush.msra.mxu0 %v259
    %v261 = vand.u32 %v76, 4294901760
    %262 = vmatmul.f32.gmra.mxu0 %v261
    %v263 = vpop.f32.mrf.mxu0
    %v264 = vadd.f32 %v139, %v263
    %v265 = vand.u32 %v77, 4294901760
    %266 = vmatmul.f32.gmra.mxu0 %v265
    %v267 = vpop.f32.mrf.mxu0
    %v268 = vadd.f32 %v147, %v267
    %v269 = vand.u32 %v78, 4294901760
    %270 = vmatmul.f32.gmra.mxu0 %v269
    %v271 = vpop.f32.mrf.mxu0
    %v272 = vadd.f32 %v155, %v271
    %v273 = vand.u32 %v79, 4294901760
    %274 = vmatmul.f32.gmra.mxu0 %v273
    %v275 = vpop.f32.mrf.mxu0
    %v276 = vadd.f32 %v163, %v275
    %277 = vdwg.mxu0
    %v278 = vand.u32 %v95, 4294901760
    %v279 = vsub.f32 %v95, %v278
    %280 = vmatpush.msra.mxu0 %v279
    %v281 = vand.u32 %v94, 4294901760
    %v282 = vsub.f32 %v94, %v281
    %283 = vmatpush.msra.mxu0 %v282
    %v284 = vand.u32 %v93, 4294901760
    %v285 = vsub.f32 %v93, %v284
    %286 = vmatpush.msra.mxu0 %v285
    %v287 = vand.u32 %v92, 4294901760
    %v288 = vsub.f32 %v92, %v287
    %289 = vmatpush.msra.mxu0 %v288
    %v290 = vand.u32 %v91, 4294901760
    %v291 = vsub.f32 %v91, %v290
    %292 = vmatpush.msra.mxu0 %v291
    %v293 = vand.u32 %v90, 4294901760
    %v294 = vsub.f32 %v90, %v293
    %295 = vmatpush.msra.mxu0 %v294
    %v296 = vand.u32 %v89, 4294901760
    %v297 = vsub.f32 %v89, %v296
    %298 = vmatpush.msra.mxu0 %v297
    %v299 = vand.u32 %v88, 4294901760
    %v300 = vsub.f32 %v88, %v299
    %301 = vmatpush.msra.mxu0 %v300
    %v302 = vand.u32 %v87, 4294901760
    %v303 = vsub.f32 %v87, %v302
    %304 = vmatpush.msra.mxu0 %v303
    %v305 = vand.u32 %v86, 4294901760
    %v306 = vsub.f32 %v86, %v305
    %307 = vmatpush.msra.mxu0 %v306
    %v308 = vand.u32 %v85, 4294901760
    %v309 = vsub.f32 %v85, %v308
    %310 = vmatpush.msra.mxu0 %v309
    %v311 = vand.u32 %v84, 4294901760
    %v312 = vsub.f32 %v84, %v311
    %313 = vmatpush.msra.mxu0 %v312
    %v314 = vand.u32 %v83, 4294901760
    %v315 = vsub.f32 %v83, %v314
    %316 = vmatpush.msra.mxu0 %v315
    %v317 = vand.u32 %v82, 4294901760
    %v318 = vsub.f32 %v82, %v317
    %319 = vmatpush.msra.mxu0 %v318
    %v320 = vand.u32 %v81, 4294901760
    %v321 = vsub.f32 %v81, %v320
    %322 = vmatpush.msra.mxu0 %v321
    %v323 = vand.u32 %v80, 4294901760
    %v324 = vsub.f32 %v80, %v323
    %325 = vmatpush.msra.mxu0 %v324
    %v326 = vand.u32 %v76, 4294901760
    %v327 = vsub.f32 %v76, %v326
    %328 = vmatmul.f32.gmra.mxu0 %v327
    %v329 = vpop.f32.mrf.mxu0
    %v330 = vadd.f32 %v264, %v329
    %v331 = vand.u32 %v77, 4294901760
    %v332 = vsub.f32 %v77, %v331
    %333 = vmatmul.f32.gmra.mxu0 %v332
    %v334 = vpop.f32.mrf.mxu0
    %v335 = vadd.f32 %v268, %v334
    %v336 = vand.u32 %v78, 4294901760
    %v337 = vsub.f32 %v78, %v336
    %338 = vmatmul.f32.gmra.mxu0 %v337
    %v339 = vpop.f32.mrf.mxu0
    %v340 = vadd.f32 %v272, %v339
    %v341 = vand.u32 %v79, 4294901760
    %v342 = vsub.f32 %v79, %v341
    %343 = vmatmul.f32.gmra.mxu0 %v342
    %v344 = vpop.f32.mrf.mxu0
    %v345 = vadd.f32 %v276, %v344
    %346 = vdwg.mxu0
    %v347 = vand.u32 %v95, 4294901760
    %348 = vmatpush.msra.mxu0 %v347
    %v349 = vand.u32 %v94, 4294901760
    %350 = vmatpush.msra.mxu0 %v349
    %v351 = vand.u32 %v93, 4294901760
    %352 = vmatpush.msra.mxu0 %v351
    %v353 = vand.u32 %v92, 4294901760
    %354 = vmatpush.msra.mxu0 %v353
    %v355 = vand.u32 %v91, 4294901760
    %356 = vmatpush.msra.mxu0 %v355
    %v357 = vand.u32 %v90, 4294901760
    %358 = vmatpush.msra.mxu0 %v357
    %v359 = vand.u32 %v89, 4294901760
    %360 = vmatpush.msra.mxu0 %v359
    %v361 = vand.u32 %v88, 4294901760
    %362 = vmatpush.msra.mxu0 %v361
    %v363 = vand.u32 %v87, 4294901760
    %364 = vmatpush.msra.mxu0 %v363
    %v365 = vand.u32 %v86, 4294901760
    %366 = vmatpush.msra.mxu0 %v365
    %v367 = vand.u32 %v85, 4294901760
    %368 = vmatpush.msra.mxu0 %v367
    %v369 = vand.u32 %v84, 4294901760
    %370 = vmatpush.msra.mxu0 %v369
    %v371 = vand.u32 %v83, 4294901760
    %372 = vmatpush.msra.mxu0 %v371
    %v373 = vand.u32 %v82, 4294901760
    %374 = vmatpush.msra.mxu0 %v373
    %v375 = vand.u32 %v81, 4294901760
    %376 = vmatpush.msra.mxu0 %v375
    %v377 = vand.u32 %v80, 4294901760
    %378 = vmatpush.msra.mxu0 %v377
    %v379 = vand.u32 %v76, 4294901760
    %v380 = vsub.f32 %v76, %v379
    %v381 = vand.u32 %v380, 4294901760
    %382 = vmatmul.f32.gmra.mxu0 %v381
    %v383 = vpop.f32.mrf.mxu0
    %v384 = vadd.f32 %v330, %v383
    %v385 = vand.u32 %v77, 4294901760
    %v386 = vsub.f32 %v77, %v385
    %v387 = vand.u32 %v386, 4294901760
    %388 = vmatmul.f32.gmra.mxu0 %v387
    %v389 = vpop.f32.mrf.mxu0
    %v390 = vadd.f32 %v335, %v389
    %v391 = vand.u32 %v78, 4294901760
    %v392 = vsub.f32 %v78, %v391
    %v393 = vand.u32 %v392, 4294901760
    %394 = vmatmul.f32.gmra.mxu0 %v393
    %v395 = vpop.f32.mrf.mxu0
    %v396 = vadd.f32 %v340, %v395
    %v397 = vand.u32 %v79, 4294901760
    %v398 = vsub.f32 %v79, %v397
    %v399 = vand.u32 %v398, 4294901760
    %400 = vmatmul.f32.gmra.mxu0 %v399
    %v401 = vpop.f32.mrf.mxu0
    %v402 = vadd.f32 %v345, %v401
    %403 = vdwg.mxu0
    %v404 = vand.u32 %v95, 4294901760
    %v405 = vsub.f32 %v95, %v404
    %v406 = vand.u32 %v405, 4294901760
    %407 = vmatpush.msra.mxu0 %v406
    %v408 = vand.u32 %v94, 4294901760
    %v409 = vsub.f32 %v94, %v408
    %v410 = vand.u32 %v409, 4294901760
    %411 = vmatpush.msra.mxu0 %v410
    %v412 = vand.u32 %v93, 4294901760
    %v413 = vsub.f32 %v93, %v412
    %v414 = vand.u32 %v413, 4294901760
    %415 = vmatpush.msra.mxu0 %v414
    %v416 = vand.u32 %v92, 4294901760
    %v417 = vsub.f32 %v92, %v416
    %v418 = vand.u32 %v417, 4294901760
    %419 = vmatpush.msra.mxu0 %v418
    %v420 = vand.u32 %v91, 4294901760
    %v421 = vsub.f32 %v91, %v420
    %v422 = vand.u32 %v421, 4294901760
    %423 = vmatpush.msra.mxu0 %v422
    %v424 = vand.u32 %v90, 4294901760
    %v425 = vsub.f32 %v90, %v424
    %v426 = vand.u32 %v425, 4294901760
    %427 = vmatpush.msra.mxu0 %v426
    %v428 = vand.u32 %v89, 4294901760
    %v429 = vsub.f32 %v89, %v428
    %v430 = vand.u32 %v429, 4294901760
    %431 = vmatpush.msra.mxu0 %v430
    %v432 = vand.u32 %v88, 4294901760
    %v433 = vsub.f32 %v88, %v432
    %v434 = vand.u32 %v433, 4294901760
    %435 = vmatpush.msra.mxu0 %v434
    %v436 = vand.u32 %v87, 4294901760
    %v437 = vsub.f32 %v87, %v436
    %v438 = vand.u32 %v437, 4294901760
    %439 = vmatpush.msra.mxu0 %v438
    %v440 = vand.u32 %v86, 4294901760
    %v441 = vsub.f32 %v86, %v440
    %v442 = vand.u32 %v441, 4294901760
    %443 = vmatpush.msra.mxu0 %v442
    %v444 = vand.u32 %v85, 4294901760
    %v445 = vsub.f32 %v85, %v444
    %v446 = vand.u32 %v445, 4294901760
    %447 = vmatpush.msra.mxu0 %v446
    %v448 = vand.u32 %v84, 4294901760
    %v449 = vsub.f32 %v84, %v448
    %v450 = vand.u32 %v449, 4294901760
    %451 = vmatpush.msra.mxu0 %v450
    %v452 = vand.u32 %v83, 4294901760
    %v453 = vsub.f32 %v83, %v452
    %v454 = vand.u32 %v453, 4294901760
    %455 = vmatpush.msra.mxu0 %v454
    %v456 = vand.u32 %v82, 4294901760
    %v457 = vsub.f32 %v82, %v456
    %v458 = vand.u32 %v457, 4294901760
    %459 = vmatpush.msra.mxu0 %v458
    %v460 = vand.u32 %v81, 4294901760
    %v461 = vsub.f32 %v81, %v460
    %v462 = vand.u32 %v461, 4294901760
    %463 = vmatpush.msra.mxu0 %v462
    %v464 = vand.u32 %v80, 4294901760
    %v465 = vsub.f32 %v80, %v464
    %v466 = vand.u32 %v465, 4294901760
    %467 = vmatpush.msra.mxu0 %v466
    %v468 = vand.u32 %v76, 4294901760
    %469 = vmatmul.f32.gmra.mxu0 %v468
    %v470 = vpop.f32.mrf.mxu0
    %v471 = vadd.f32 %v384, %v470
    %v472 = vand.u32 %v77, 4294901760
    %473 = vmatmul.f32.gmra.mxu0 %v472
    %v474 = vpop.f32.mrf.mxu0
    %v475 = vadd.f32 %v390, %v474
    %v476 = vand.u32 %v78, 4294901760
    %477 = vmatmul.f32.gmra.mxu0 %v476
    %v478 = vpop.f32.mrf.mxu0
    %v479 = vadd.f32 %v396, %v478
    %v480 = vand.u32 %v79, 4294901760
    %481 = vmatmul.f32.gmra.mxu0 %v480
    %v482 = vpop.f32.mrf.mxu0
    %v483 = vadd.f32 %v402, %v482
    %484 = vdwg.mxu0
    %v485 = vand.u32 %v95, 4294901760
    %486 = vmatpush.msra.mxu0 %v485
    %v487 = vand.u32 %v94, 4294901760
    %488 = vmatpush.msra.mxu0 %v487
    %v489 = vand.u32 %v93, 4294901760
    %490 = vmatpush.msra.mxu0 %v489
    %v491 = vand.u32 %v92, 4294901760
    %492 = vmatpush.msra.mxu0 %v491
    %v493 = vand.u32 %v91, 4294901760
    %494 = vmatpush.msra.mxu0 %v493
    %v495 = vand.u32 %v90, 4294901760
    %496 = vmatpush.msra.mxu0 %v495
    %v497 = vand.u32 %v89, 4294901760
    %498 = vmatpush.msra.mxu0 %v497
    %v499 = vand.u32 %v88, 4294901760
    %500 = vmatpush.msra.mxu0 %v499
    %v501 = vand.u32 %v87, 4294901760
    %502 = vmatpush.msra.mxu0 %v501
    %v503 = vand.u32 %v86, 4294901760
    %504 = vmatpush.msra.mxu0 %v503
    %v505 = vand.u32 %v85, 4294901760
    %506 = vmatpush.msra.mxu0 %v505
    %v507 = vand.u32 %v84, 4294901760
    %508 = vmatpush.msra.mxu0 %v507
    %v509 = vand.u32 %v83, 4294901760
    %510 = vmatpush.msra.mxu0 %v509
    %v511 = vand.u32 %v82, 4294901760
    %512 = vmatpush.msra.mxu0 %v511
    %v513 = vand.u32 %v81, 4294901760
    %514 = vmatpush.msra.mxu0 %v513
    %v515 = vand.u32 %v80, 4294901760
    %516 = vmatpush.msra.mxu0 %v515
    %v517 = vand.u32 %v76, 4294901760
    %518 = vmatmul.f32.gmra.mxu0 %v517
    %v519 = vpop.f32.mrf.mxu0
    %v520 = vadd.f32 %v471, %v519
    %v521 = vand.u32 %v77, 4294901760
    %522 = vmatmul.f32.gmra.mxu0 %v521
    %v523 = vpop.f32.mrf.mxu0
    %v524 = vadd.f32 %v475, %v523
    %v525 = vand.u32 %v78, 4294901760
    %526 = vmatmul.f32.gmra.mxu0 %v525
    %v527 = vpop.f32.mrf.mxu0
    %v528 = vadd.f32 %v479, %v527
    %v529 = vand.u32 %v79, 4294901760
    %530 = vmatmul.f32.gmra.mxu0 %v529
    %v531 = vpop.f32.mrf.mxu0
    %v532 = vadd.f32 %v483, %v531
    %533 = vdwg.mxu0
    %v534 = vmul.f32 %v520, 0.5
    %v535 = vmul.f32 %v524, 0.5
    %v536 = vmul.f32 %v528, 0.5
    %v537 = vmul.f32 %v532, 0.5
    %v538 = vmul.f32 %v520, 0.70710677
    %v539 = vmul.f32 %v524, 0.70710677
    %v540 = vmul.f32 %v528, 0.70710677
    %v541 = vmul.f32 %v532, 0.70710677
    %v542 = vmul.f32 %v538, %v538
    %v543 = vmin.f32 16.0, %v542
    %v544 = vmul.f32 %v543, 2.1237322e-06
    %v545 = vadd.f32 %v544, 0.00028619796
    %v546 = vmul.f32 %v543, %v545
    %v547 = vadd.f32 %v546, 0.0036580483
    %v548 = vmul.f32 %v543, %v547
    %v549 = vadd.f32 %v548, 0.05243302
    %v550 = vmul.f32 %v543, %v549
    %v551 = vadd.f32 %v550, 0.18741608
    %v552 = vmul.f32 %v543, %v551
    %v553 = vadd.f32 %v552, 1.1283791
    %v554 = vmul.f32 %v538, %v553
    %v555 = vmul.f32 %v543, 3.8918573e-05
    %v556 = vadd.f32 %v555, 0.001143296
    %v557 = vmul.f32 %v543, %v556
    %v558 = vadd.f32 %v557, 0.014752088
    %v559 = vmul.f32 %v543, %v558
    %v560 = vadd.f32 %v559, 0.112945676
    %v561 = vmul.f32 %v543, %v560
    %v562 = vadd.f32 %v561, 0.4994258
    %v563 = vmul.f32 %v543, %v562
    %v564 = vadd.f32 %v563, 1.0
    %v565 = vrcp.pop %v564
    %v566 = vmul.f32 %v564, %v565
    %v567 = vsub.f32 1.0, %v566
    %v568 = vmul.f32 %v565, %v567
    %v569 = vadd.f32 %v565, %v568
    %vm570 = vweird.f32 %v564
    %vm571 = vweird.f32 %v565
    %vm572 = vmor %vm570, %vm571
    %v573 = vsel %vm572, %v565, %v569
    %v574 = vand.u32 2147483647, %v564
    %vm575 = vcmp.eq.f32.partialorder %v574, 8.507059e+37
    %v576 = vand.u32 %v564, 2147483648
    %v577 = vor.u32 1.1754944e-38, %v576
    %v578 = vsel %vm575, %v577, %v573
    %v579 = vmul.f32 %v554, %v578
    %v580 = vmin.f32 %v579, 1.0
    %v581 = vmax.f32 %v580, -1.0
    %v582 = vmul.f32 %v539, %v539
    %v583 = vmin.f32 16.0, %v582
    %v584 = vmul.f32 %v583, 2.1237322e-06
    %v585 = vadd.f32 %v584, 0.00028619796
    %v586 = vmul.f32 %v583, %v585
    %v587 = vadd.f32 %v586, 0.0036580483
    %v588 = vmul.f32 %v583, %v587
    %v589 = vadd.f32 %v588, 0.05243302
    %v590 = vmul.f32 %v583, %v589
    %v591 = vadd.f32 %v590, 0.18741608
    %v592 = vmul.f32 %v583, %v591
    %v593 = vadd.f32 %v592, 1.1283791
    %v594 = vmul.f32 %v539, %v593
    %v595 = vmul.f32 %v583, 3.8918573e-05
    %v596 = vadd.f32 %v595, 0.001143296
    %v597 = vmul.f32 %v583, %v596
    %v598 = vadd.f32 %v597, 0.014752088
    %v599 = vmul.f32 %v583, %v598
    %v600 = vadd.f32 %v599, 0.112945676
    %v601 = vmul.f32 %v583, %v600
    %v602 = vadd.f32 %v601, 0.4994258
    %v603 = vmul.f32 %v583, %v602
    %v604 = vadd.f32 %v603, 1.0
    %v605 = vrcp.pop %v604
    %v606 = vmul.f32 %v604, %v605
    %v607 = vsub.f32 1.0, %v606
    %v608 = vmul.f32 %v605, %v607
    %v609 = vadd.f32 %v605, %v608
    %vm610 = vweird.f32 %v604
    %vm611 = vweird.f32 %v605
    %vm612 = vmor %vm610, %vm611
    %v613 = vsel %vm612, %v605, %v609
    %v614 = vand.u32 2147483647, %v604
    %vm615 = vcmp.eq.f32.partialorder %v614, 8.507059e+37
    %v616 = vand.u32 %v604, 2147483648
    %v617 = vor.u32 1.1754944e-38, %v616
    %v618 = vsel %vm615, %v617, %v613
    %v619 = vmul.f32 %v594, %v618
    %v620 = vmin.f32 %v619, 1.0
    %v621 = vmax.f32 %v620, -1.0
    %v622 = vmul.f32 %v540, %v540
    %v623 = vmin.f32 16.0, %v622
    %v624 = vmul.f32 %v623, 2.1237322e-06
    %v625 = vadd.f32 %v624, 0.00028619796
    %v626 = vmul.f32 %v623, %v625
    %v627 = vadd.f32 %v626, 0.0036580483
    %v628 = vmul.f32 %v623, %v627
    %v629 = vadd.f32 %v628, 0.05243302
    %v630 = vmul.f32 %v623, %v629
    %v631 = vadd.f32 %v630, 0.18741608
    %v632 = vmul.f32 %v623, %v631
    %v633 = vadd.f32 %v632, 1.1283791
    %v634 = vmul.f32 %v540, %v633
    %v635 = vmul.f32 %v623, 3.8918573e-05
    %v636 = vadd.f32 %v635, 0.001143296
    %v637 = vmul.f32 %v623, %v636
    %v638 = vadd.f32 %v637, 0.014752088
    %v639 = vmul.f32 %v623, %v638
    %v640 = vadd.f32 %v639, 0.112945676
    %v641 = vmul.f32 %v623, %v640
    %v642 = vadd.f32 %v641, 0.4994258
    %v643 = vmul.f32 %v623, %v642
    %v644 = vadd.f32 %v643, 1.0
    %v645 = vrcp.pop %v644
    %v646 = vmul.f32 %v644, %v645
    %v647 = vsub.f32 1.0, %v646
    %v648 = vmul.f32 %v645, %v647
    %v649 = vadd.f32 %v645, %v648
    %vm650 = vweird.f32 %v644
    %vm651 = vweird.f32 %v645
    %vm652 = vmor %vm650, %vm651
    %v653 = vsel %vm652, %v645, %v649
    %v654 = vand.u32 2147483647, %v644
    %vm655 = vcmp.eq.f32.partialorder %v654, 8.507059e+37
    %v656 = vand.u32 %v644, 2147483648
    %v657 = vor.u32 1.1754944e-38, %v656
    %v658 = vsel %vm655, %v657, %v653
    %v659 = vmul.f32 %v634, %v658
    %v660 = vmin.f32 %v659, 1.0
    %v661 = vmax.f32 %v660, -1.0
    %v662 = vmul.f32 %v541, %v541
    %v663 = vmin.f32 16.0, %v662
    %v664 = vmul.f32 %v663, 2.1237322e-06
    %v665 = vadd.f32 %v664, 0.00028619796
    %v666 = vmul.f32 %v663, %v665
    %v667 = vadd.f32 %v666, 0.0036580483
    %v668 = vmul.f32 %v663, %v667
    %v669 = vadd.f32 %v668, 0.05243302
    %v670 = vmul.f32 %v663, %v669
    %v671 = vadd.f32 %v670, 0.18741608
    %v672 = vmul.f32 %v663, %v671
    %v673 = vadd.f32 %v672, 1.1283791
    %v674 = vmul.f32 %v541, %v673
    %v675 = vmul.f32 %v663, 3.8918573e-05
    %v676 = vadd.f32 %v675, 0.001143296
    %v677 = vmul.f32 %v663, %v676
    %v678 = vadd.f32 %v677, 0.014752088
    %v679 = vmul.f32 %v663, %v678
    %v680 = vadd.f32 %v679, 0.112945676
    %v681 = vmul.f32 %v663, %v680
    %v682 = vadd.f32 %v681, 0.4994258
    %v683 = vmul.f32 %v663, %v682
    %v684 = vadd.f32 %v683, 1.0
    %v685 = vrcp.pop %v684
    %v686 = vmul.f32 %v684, %v685
    %v687 = vsub.f32 1.0, %v686
    %v688 = vmul.f32 %v685, %v687
    %v689 = vadd.f32 %v685, %v688
    %vm690 = vweird.f32 %v684
    %vm691 = vweird.f32 %v685
    %vm692 = vmor %vm690, %vm691
    %v693 = vsel %vm692, %v685, %v689
    %v694 = vand.u32 2147483647, %v684
    %vm695 = vcmp.eq.f32.partialorder %v694, 8.507059e+37
    %v696 = vand.u32 %v684, 2147483648
    %v697 = vor.u32 1.1754944e-38, %v696
    %v698 = vsel %vm695, %v697, %v693
    %v699 = vmul.f32 %v674, %v698
    %v700 = vmin.f32 %v699, 1.0
    %v701 = vmax.f32 %v700, -1.0
    %v702 = vadd.f32 %v581, 1.0
    %v703 = vadd.f32 %v621, 1.0
    %v704 = vadd.f32 %v661, 1.0
    %v705 = vadd.f32 %v701, 1.0
    %v706 = vmul.f32 %v534, %v702
    %v707 = vmul.f32 %v535, %v703
    %v708 = vmul.f32 %v536, %v704
    %v709 = vmul.f32 %v537, %v705
    %v710 = vld [vmem:[#allocation2] sm:$0xff]
    %v711 = vld [vmem:[#allocation2 + $0x8] sm:$0xff]
    %v712 = vld [vmem:[#allocation2 + $0x10] sm:$0xff]
    %v713 = vld [vmem:[#allocation2 + $0x18] sm:$0xff]
    %v714 = vld [vmem:[#allocation8] sm:$0xff]
    %v715 = vld [vmem:[#allocation8 + $0x8] sm:$0xff]
    %v716 = vld [vmem:[#allocation8 + $0x10] sm:$0xff]
    %v717 = vld [vmem:[#allocation8 + $0x18] sm:$0xff]
    %v718 = vld [vmem:[#allocation8 + $0x20] sm:$0xff]
    %v719 = vld [vmem:[#allocation8 + $0x28] sm:$0xff]
    %v720 = vld [vmem:[#allocation8 + $0x30] sm:$0xff]
    %v721 = vld [vmem:[#allocation8 + $0x38] sm:$0xff]
    %v722 = vld [vmem:[#allocation8 + $0x40] sm:$0xff]
    %v723 = vld [vmem:[#allocation8 + $0x48] sm:$0xff]
    %v724 = vld [vmem:[#allocation8 + $0x50] sm:$0xff]
    %v725 = vld [vmem:[#allocation8 + $0x58] sm:$0xff]
    %v726 = vld [vmem:[#allocation8 + $0x60] sm:$0xff]
    %v727 = vld [vmem:[#allocation8 + $0x68] sm:$0xff]
    %v728 = vld [vmem:[#allocation8 + $0x70] sm:$0xff]
    %v729 = vld [vmem:[#allocation8 + $0x78] sm:$0xff]
    %v730 = vand.u32 %v729, 4294901760
    %731 = vmatpush.msra.mxu0 %v730
    %v732 = vand.u32 %v728, 4294901760
    %733 = vmatpush.msra.mxu0 %v732
    %v734 = vand.u32 %v727, 4294901760
    %735 = vmatpush.msra.mxu0 %v734
    %v736 = vand.u32 %v726, 4294901760
    %737 = vmatpush.msra.mxu0 %v736
    %v738 = vand.u32 %v725, 4294901760
    %739 = vmatpush.msra.mxu0 %v738
    %v740 = vand.u32 %v724, 4294901760
    %741 = vmatpush.msra.mxu0 %v740
    %v742 = vand.u32 %v723, 4294901760
    %743 = vmatpush.msra.mxu0 %v742
    %v744 = vand.u32 %v722, 4294901760
    %745 = vmatpush.msra.mxu0 %v744
    %v746 = vand.u32 %v721, 4294901760
    %747 = vmatpush.msra.mxu0 %v746
    %v748 = vand.u32 %v720, 4294901760
    %749 = vmatpush.msra.mxu0 %v748
    %v750 = vand.u32 %v719, 4294901760
    %751 = vmatpush.msra.mxu0 %v750
    %v752 = vand.u32 %v718, 4294901760
    %753 = vmatpush.msra.mxu0 %v752
    %v754 = vand.u32 %v717, 4294901760
    %755 = vmatpush.msra.mxu0 %v754
    %v756 = vand.u32 %v716, 4294901760
    %757 = vmatpush.msra.mxu0 %v756
    %v758 = vand.u32 %v715, 4294901760
    %759 = vmatpush.msra.mxu0 %v758
    %v760 = vand.u32 %v714, 4294901760
    %761 = vmatpush.msra.mxu0 %v760
    %v762 = vand.u32 %v706, 4294901760
    %v763 = vsub.f32 %v706, %v762
    %v764 = vand.u32 %v763, 4294901760
    %v765 = vsub.f32 %v763, %v764
    %v766 = vand.u32 %v765, 4294901760
    %767 = vmatmul.f32.gmra.mxu0 %v766
    %v768 = vpop.f32.mrf.mxu0
    %v769 = vadd.f32 0.0, %v768
    %v770 = vand.u32 %v707, 4294901760
    %v771 = vsub.f32 %v707, %v770
    %v772 = vand.u32 %v771, 4294901760
    %v773 = vsub.f32 %v771, %v772
    %v774 = vand.u32 %v773, 4294901760
    %775 = vmatmul.f32.gmra.mxu0 %v774
    %v776 = vpop.f32.mrf.mxu0
    %v777 = vadd.f32 0.0, %v776
    %v778 = vand.u32 %v708, 4294901760
    %v779 = vsub.f32 %v708, %v778
    %v780 = vand.u32 %v779, 4294901760
    %v781 = vsub.f32 %v779, %v780
    %v782 = vand.u32 %v781, 4294901760
    %783 = vmatmul.f32.gmra.mxu0 %v782
    %v784 = vpop.f32.mrf.mxu0
    %v785 = vadd.f32 0.0, %v784
    %v786 = vand.u32 %v709, 4294901760
    %v787 = vsub.f32 %v709, %v786
    %v788 = vand.u32 %v787, 4294901760
    %v789 = vsub.f32 %v787, %v788
    %v790 = vand.u32 %v789, 4294901760
    %791 = vmatmul.f32.gmra.mxu0 %v790
    %v792 = vpop.f32.mrf.mxu0
    %v793 = vadd.f32 0.0, %v792
    %794 = vdwg.mxu0
    %v795 = vand.u32 %v729, 4294901760
    %v796 = vsub.f32 %v729, %v795
    %v797 = vand.u32 %v796, 4294901760
    %v798 = vsub.f32 %v796, %v797
    %v799 = vand.u32 %v798, 4294901760
    %800 = vmatpush.msra.mxu0 %v799
    %v801 = vand.u32 %v728, 4294901760
    %v802 = vsub.f32 %v728, %v801
    %v803 = vand.u32 %v802, 4294901760
    %v804 = vsub.f32 %v802, %v803
    %v805 = vand.u32 %v804, 4294901760
    %806 = vmatpush.msra.mxu0 %v805
    %v807 = vand.u32 %v727, 4294901760
    %v808 = vsub.f32 %v727, %v807
    %v809 = vand.u32 %v808, 4294901760
    %v810 = vsub.f32 %v808, %v809
    %v811 = vand.u32 %v810, 4294901760
    %812 = vmatpush.msra.mxu0 %v811
    %v813 = vand.u32 %v726, 4294901760
    %v814 = vsub.f32 %v726, %v813
    %v815 = vand.u32 %v814, 4294901760
    %v816 = vsub.f32 %v814, %v815
    %v817 = vand.u32 %v816, 4294901760
    %818 = vmatpush.msra.mxu0 %v817
    %v819 = vand.u32 %v725, 4294901760
    %v820 = vsub.f32 %v725, %v819
    %v821 = vand.u32 %v820, 4294901760
    %v822 = vsub.f32 %v820, %v821
    %v823 = vand.u32 %v822, 4294901760
    %824 = vmatpush.msra.mxu0 %v823
    %v825 = vand.u32 %v724, 4294901760
    %v826 = vsub.f32 %v724, %v825
    %v827 = vand.u32 %v826, 4294901760
    %v828 = vsub.f32 %v826, %v827
    %v829 = vand.u32 %v828, 4294901760
    %830 = vmatpush.msra.mxu0 %v829
    %v831 = vand.u32 %v723, 4294901760
    %v832 = vsub.f32 %v723, %v831
    %v833 = vand.u32 %v832, 4294901760
    %v834 = vsub.f32 %v832, %v833
    %v835 = vand.u32 %v834, 4294901760
    %836 = vmatpush.msra.mxu0 %v835
    %v837 = vand.u32 %v722, 4294901760
    %v838 = vsub.f32 %v722, %v837
    %v839 = vand.u32 %v838, 4294901760
    %v840 = vsub.f32 %v838, %v839
    %v841 = vand.u32 %v840, 4294901760
    %842 = vmatpush.msra.mxu0 %v841
    %v843 = vand.u32 %v721, 4294901760
    %v844 = vsub.f32 %v721, %v843
    %v845 = vand.u32 %v844, 4294901760
    %v846 = vsub.f32 %v844, %v845
    %v847 = vand.u32 %v846, 4294901760
    %848 = vmatpush.msra.mxu0 %v847
    %v849 = vand.u32 %v720, 4294901760
    %v850 = vsub.f32 %v720, %v849
    %v851 = vand.u32 %v850, 4294901760
    %v852 = vsub.f32 %v850, %v851
    %v853 = vand.u32 %v852, 4294901760
    %854 = vmatpush.msra.mxu0 %v853
    %v855 = vand.u32 %v719, 4294901760
    %v856 = vsub.f32 %v719, %v855
    %v857 = vand.u32 %v856, 4294901760
    %v858 = vsub.f32 %v856, %v857
    %v859 = vand.u32 %v858, 4294901760
    %860 = vmatpush.msra.mxu0 %v859
    %v861 = vand.u32 %v718, 4294901760
    %v862 = vsub.f32 %v718, %v861
    %v863 = vand.u32 %v862, 4294901760
    %v864 = vsub.f32 %v862, %v863
    %v865 = vand.u32 %v864, 4294901760
    %866 = vmatpush.msra.mxu0 %v865
    %v867 = vand.u32 %v717, 4294901760
    %v868 = vsub.f32 %v717, %v867
    %v869 = vand.u32 %v868, 4294901760
    %v870 = vsub.f32 %v868, %v869
    %v871 = vand.u32 %v870, 4294901760
    %872 = vmatpush.msra.mxu0 %v871
    %v873 = vand.u32 %v716, 4294901760
    %v874 = vsub.f32 %v716, %v873
    %v875 = vand.u32 %v874, 4294901760
    %v876 = vsub.f32 %v874, %v875
    %v877 = vand.u32 %v876, 4294901760
    %878 = vmatpush.msra.mxu0 %v877
    %v879 = vand.u32 %v715, 4294901760
    %v880 = vsub.f32 %v715, %v879
    %v881 = vand.u32 %v880, 4294901760
    %v882 = vsub.f32 %v880, %v881
    %v883 = vand.u32 %v882, 4294901760
    %884 = vmatpush.msra.mxu0 %v883
    %v885 = vand.u32 %v714, 4294901760
    %v886 = vsub.f32 %v714, %v885
    %v887 = vand.u32 %v886, 4294901760
    %v888 = vsub.f32 %v886, %v887
    %v889 = vand.u32 %v888, 4294901760
    %890 = vmatpush.msra.mxu0 %v889
    %v891 = vand.u32 %v706, 4294901760
    %892 = vmatmul.f32.gmra.mxu0 %v891
    %v893 = vpop.f32.mrf.mxu0
    %v894 = vadd.f32 %v769, %v893
    %v895 = vand.u32 %v707, 4294901760
    %896 = vmatmul.f32.gmra.mxu0 %v895
    %v897 = vpop.f32.mrf.mxu0
    %v898 = vadd.f32 %v777, %v897
    %v899 = vand.u32 %v708, 4294901760
    %900 = vmatmul.f32.gmra.mxu0 %v899
    %v901 = vpop.f32.mrf.mxu0
    %v902 = vadd.f32 %v785, %v901
    %v903 = vand.u32 %v709, 4294901760
    %904 = vmatmul.f32.gmra.mxu0 %v903
    %v905 = vpop.f32.mrf.mxu0
    %v906 = vadd.f32 %v793, %v905
    %907 = vdwg.mxu0
    %v908 = vand.u32 %v729, 4294901760
    %v909 = vsub.f32 %v729, %v908
    %910 = vmatpush.msra.mxu0 %v909
    %v911 = vand.u32 %v728, 4294901760
    %v912 = vsub.f32 %v728, %v911
    %913 = vmatpush.msra.mxu0 %v912
    %v914 = vand.u32 %v727, 4294901760
    %v915 = vsub.f32 %v727, %v914
    %916 = vmatpush.msra.mxu0 %v915
    %v917 = vand.u32 %v726, 4294901760
    %v918 = vsub.f32 %v726, %v917
    %919 = vmatpush.msra.mxu0 %v918
    %v920 = vand.u32 %v725, 4294901760
    %v921 = vsub.f32 %v725, %v920
    %922 = vmatpush.msra.mxu0 %v921
    %v923 = vand.u32 %v724, 4294901760
    %v924 = vsub.f32 %v724, %v923
    %925 = vmatpush.msra.mxu0 %v924
    %v926 = vand.u32 %v723, 4294901760
    %v927 = vsub.f32 %v723, %v926
    %928 = vmatpush.msra.mxu0 %v927
    %v929 = vand.u32 %v722, 4294901760
    %v930 = vsub.f32 %v722, %v929
    %931 = vmatpush.msra.mxu0 %v930
    %v932 = vand.u32 %v721, 4294901760
    %v933 = vsub.f32 %v721, %v932
    %934 = vmatpush.msra.mxu0 %v933
    %v935 = vand.u32 %v720, 4294901760
    %v936 = vsub.f32 %v720, %v935
    %937 = vmatpush.msra.mxu0 %v936
    %v938 = vand.u32 %v719, 4294901760
    %v939 = vsub.f32 %v719, %v938
    %940 = vmatpush.msra.mxu0 %v939
    %v941 = vand.u32 %v718, 4294901760
    %v942 = vsub.f32 %v718, %v941
    %943 = vmatpush.msra.mxu0 %v942
    %v944 = vand.u32 %v717, 4294901760
    %v945 = vsub.f32 %v717, %v944
    %946 = vmatpush.msra.mxu0 %v945
    %v947 = vand.u32 %v716, 4294901760
    %v948 = vsub.f32 %v716, %v947
    %949 = vmatpush.msra.mxu0 %v948
    %v950 = vand.u32 %v715, 4294901760
    %v951 = vsub.f32 %v715, %v950
    %952 = vmatpush.msra.mxu0 %v951
    %v953 = vand.u32 %v714, 4294901760
    %v954 = vsub.f32 %v714, %v953
    %955 = vmatpush.msra.mxu0 %v954
    %v956 = vand.u32 %v706, 4294901760
    %v957 = vsub.f32 %v706, %v956
    %958 = vmatmul.f32.gmra.mxu0 %v957
    %v959 = vpop.f32.mrf.mxu0
    %v960 = vadd.f32 %v894, %v959
    %v961 = vand.u32 %v707, 4294901760
    %v962 = vsub.f32 %v707, %v961
    %963 = vmatmul.f32.gmra.mxu0 %v962
    %v964 = vpop.f32.mrf.mxu0
    %v965 = vadd.f32 %v898, %v964
    %v966 = vand.u32 %v708, 4294901760
    %v967 = vsub.f32 %v708, %v966
    %968 = vmatmul.f32.gmra.mxu0 %v967
    %v969 = vpop.f32.mrf.mxu0
    %v970 = vadd.f32 %v902, %v969
    %v971 = vand.u32 %v709, 4294901760
    %v972 = vsub.f32 %v709, %v971
    %973 = vmatmul.f32.gmra.mxu0 %v972
    %v974 = vpop.f32.mrf.mxu0
    %v975 = vadd.f32 %v906, %v974
    %976 = vdwg.mxu0
    %v977 = vand.u32 %v729, 4294901760
    %978 = vmatpush.msra.mxu0 %v977
    %v979 = vand.u32 %v728, 4294901760
    %980 = vmatpush.msra.mxu0 %v979
    %v981 = vand.u32 %v727, 4294901760
    %982 = vmatpush.msra.mxu0 %v981
    %v983 = vand.u32 %v726, 4294901760
    %984 = vmatpush.msra.mxu0 %v983
    %v985 = vand.u32 %v725, 4294901760
    %986 = vmatpush.msra.mxu0 %v985
    %v987 = vand.u32 %v724, 4294901760
    %988 = vmatpush.msra.mxu0 %v987
    %v989 = vand.u32 %v723, 4294901760
    %990 = vmatpush.msra.mxu0 %v989
    %v991 = vand.u32 %v722, 4294901760
    %992 = vmatpush.msra.mxu0 %v991
    %v993 = vand.u32 %v721, 4294901760
    %994 = vmatpush.msra.mxu0 %v993
    %v995 = vand.u32 %v720, 4294901760
    %996 = vmatpush.msra.mxu0 %v995
    %v997 = vand.u32 %v719, 4294901760
    %998 = vmatpush.msra.mxu0 %v997
    %v999 = vand.u32 %v718, 4294901760
    %1000 = vmatpush.msra.mxu0 %v999
    %v1001 = vand.u32 %v717, 4294901760
    %1002 = vmatpush.msra.mxu0 %v1001
    %v1003 = vand.u32 %v716, 4294901760
    %1004 = vmatpush.msra.mxu0 %v1003
    %v1005 = vand.u32 %v715, 4294901760
    %1006 = vmatpush.msra.mxu0 %v1005
    %v1007 = vand.u32 %v714, 4294901760
    %1008 = vmatpush.msra.mxu0 %v1007
    %v1009 = vand.u32 %v706, 4294901760
    %v1010 = vsub.f32 %v706, %v1009
    %v1011 = vand.u32 %v1010, 4294901760
    %1012 = vmatmul.f32.gmra.mxu0 %v1011
    %v1013 = vpop.f32.mrf.mxu0
    %v1014 = vadd.f32 %v960, %v1013
    %v1015 = vand.u32 %v707, 4294901760
    %v1016 = vsub.f32 %v707, %v1015
    %v1017 = vand.u32 %v1016, 4294901760
    %1018 = vmatmul.f32.gmra.mxu0 %v1017
    %v1019 = vpop.f32.mrf.mxu0
    %v1020 = vadd.f32 %v965, %v1019
    %v1021 = vand.u32 %v708, 4294901760
    %v1022 = vsub.f32 %v708, %v1021
    %v1023 = vand.u32 %v1022, 4294901760
    %1024 = vmatmul.f32.gmra.mxu0 %v1023
    %v1025 = vpop.f32.mrf.mxu0
    %v1026 = vadd.f32 %v970, %v1025
    %v1027 = vand.u32 %v709, 4294901760
    %v1028 = vsub.f32 %v709, %v1027
    %v1029 = vand.u32 %v1028, 4294901760
    %1030 = vmatmul.f32.gmra.mxu0 %v1029
    %v1031 = vpop.f32.mrf.mxu0
    %v1032 = vadd.f32 %v975, %v1031
    %1033 = vdwg.mxu0
    %v1034 = vand.u32 %v729, 4294901760
    %v1035 = vsub.f32 %v729, %v1034
    %v1036 = vand.u32 %v1035, 4294901760
    %1037 = vmatpush.msra.mxu0 %v1036
    %v1038 = vand.u32 %v728, 4294901760
    %v1039 = vsub.f32 %v728, %v1038
    %v1040 = vand.u32 %v1039, 4294901760
    %1041 = vmatpush.msra.mxu0 %v1040
    %v1042 = vand.u32 %v727, 4294901760
    %v1043 = vsub.f32 %v727, %v1042
    %v1044 = vand.u32 %v1043, 4294901760
    %1045 = vmatpush.msra.mxu0 %v1044
    %v1046 = vand.u32 %v726, 4294901760
    %v1047 = vsub.f32 %v726, %v1046
    %v1048 = vand.u32 %v1047, 4294901760
    %1049 = vmatpush.msra.mxu0 %v1048
    %v1050 = vand.u32 %v725, 4294901760
    %v1051 = vsub.f32 %v725, %v1050
    %v1052 = vand.u32 %v1051, 4294901760
    %1053 = vmatpush.msra.mxu0 %v1052
    %v1054 = vand.u32 %v724, 4294901760
    %v1055 = vsub.f32 %v724, %v1054
    %v1056 = vand.u32 %v1055, 4294901760
    %1057 = vmatpush.msra.mxu0 %v1056
    %v1058 = vand.u32 %v723, 4294901760
    %v1059 = vsub.f32 %v723, %v1058
    %v1060 = vand.u32 %v1059, 4294901760
    %1061 = vmatpush.msra.mxu0 %v1060
    %v1062 = vand.u32 %v722, 4294901760
    %v1063 = vsub.f32 %v722, %v1062
    %v1064 = vand.u32 %v1063, 4294901760
    %1065 = vmatpush.msra.mxu0 %v1064
    %v1066 = vand.u32 %v721, 4294901760
    %v1067 = vsub.f32 %v721, %v1066
    %v1068 = vand.u32 %v1067, 4294901760
    %1069 = vmatpush.msra.mxu0 %v1068
    %v1070 = vand.u32 %v720, 4294901760
    %v1071 = vsub.f32 %v720, %v1070
    %v1072 = vand.u32 %v1071, 4294901760
    %1073 = vmatpush.msra.mxu0 %v1072
    %v1074 = vand.u32 %v719, 4294901760
    %v1075 = vsub.f32 %v719, %v1074
    %v1076 = vand.u32 %v1075, 4294901760
    %1077 = vmatpush.msra.mxu0 %v1076
    %v1078 = vand.u32 %v718, 4294901760
    %v1079 = vsub.f32 %v718, %v1078
    %v1080 = vand.u32 %v1079, 4294901760
    %1081 = vmatpush.msra.mxu0 %v1080
    %v1082 = vand.u32 %v717, 4294901760
    %v1083 = vsub.f32 %v717, %v1082
    %v1084 = vand.u32 %v1083, 4294901760
    %1085 = vmatpush.msra.mxu0 %v1084
    %v1086 = vand.u32 %v716, 4294901760
    %v1087 = vsub.f32 %v716, %v1086
    %v1088 = vand.u32 %v1087, 4294901760
    %1089 = vmatpush.msra.mxu0 %v1088
    %v1090 = vand.u32 %v715, 4294901760
    %v1091 = vsub.f32 %v715, %v1090
    %v1092 = vand.u32 %v1091, 4294901760
    %1093 = vmatpush.msra.mxu0 %v1092
    %v1094 = vand.u32 %v714, 4294901760
    %v1095 = vsub.f32 %v714, %v1094
    %v1096 = vand.u32 %v1095, 4294901760
    %1097 = vmatpush.msra.mxu0 %v1096
    %v1098 = vand.u32 %v706, 4294901760
    %1099 = vmatmul.f32.gmra.mxu0 %v1098
    %v1100 = vpop.f32.mrf.mxu0
    %v1101 = vadd.f32 %v1014, %v1100
    %v1102 = vand.u32 %v707, 4294901760
    %1103 = vmatmul.f32.gmra.mxu0 %v1102
    %v1104 = vpop.f32.mrf.mxu0
    %v1105 = vadd.f32 %v1020, %v1104
    %v1106 = vand.u32 %v708, 4294901760
    %1107 = vmatmul.f32.gmra.mxu0 %v1106
    %v1108 = vpop.f32.mrf.mxu0
    %v1109 = vadd.f32 %v1026, %v1108
    %v1110 = vand.u32 %v709, 4294901760
    %1111 = vmatmul.f32.gmra.mxu0 %v1110
    %v1112 = vpop.f32.mrf.mxu0
    %v1113 = vadd.f32 %v1032, %v1112
    %1114 = vdwg.mxu0
    %v1115 = vand.u32 %v729, 4294901760
    %1116 = vmatpush.msra.mxu0 %v1115
    %v1117 = vand.u32 %v728, 4294901760
    %1118 = vmatpush.msra.mxu0 %v1117
    %v1119 = vand.u32 %v727, 4294901760
    %1120 = vmatpush.msra.mxu0 %v1119
    %v1121 = vand.u32 %v726, 4294901760
    %1122 = vmatpush.msra.mxu0 %v1121
    %v1123 = vand.u32 %v725, 4294901760
    %1124 = vmatpush.msra.mxu0 %v1123
    %v1125 = vand.u32 %v724, 4294901760
    %1126 = vmatpush.msra.mxu0 %v1125
    %v1127 = vand.u32 %v723, 4294901760
    %1128 = vmatpush.msra.mxu0 %v1127
    %v1129 = vand.u32 %v722, 4294901760
    %1130 = vmatpush.msra.mxu0 %v1129
    %v1131 = vand.u32 %v721, 4294901760
    %1132 = vmatpush.msra.mxu0 %v1131
    %v1133 = vand.u32 %v720, 4294901760
    %1134 = vmatpush.msra.mxu0 %v1133
    %v1135 = vand.u32 %v719, 4294901760
    %1136 = vmatpush.msra.mxu0 %v1135
    %v1137 = vand.u32 %v718, 4294901760
    %1138 = vmatpush.msra.mxu0 %v1137
    %v1139 = vand.u32 %v717, 4294901760
    %1140 = vmatpush.msra.mxu0 %v1139
    %v1141 = vand.u32 %v716, 4294901760
    %1142 = vmatpush.msra.mxu0 %v1141
    %v1143 = vand.u32 %v715, 4294901760
    %1144 = vmatpush.msra.mxu0 %v1143
    %v1145 = vand.u32 %v714, 4294901760
    %1146 = vmatpush.msra.mxu0 %v1145
    %v1147 = vand.u32 %v706, 4294901760
    %1148 = vmatmul.f32.gmra.mxu0 %v1147
    %v1149 = vpop.f32.mrf.mxu0
    %v1150 = vadd.f32 %v1101, %v1149
    %v1151 = vand.u32 %v707, 4294901760
    %1152 = vmatmul.f32.gmra.mxu0 %v1151
    %v1153 = vpop.f32.mrf.mxu0
    %v1154 = vadd.f32 %v1105, %v1153
    %v1155 = vand.u32 %v708, 4294901760
    %1156 = vmatmul.f32.gmra.mxu0 %v1155
    %v1157 = vpop.f32.mrf.mxu0
    %v1158 = vadd.f32 %v1109, %v1157
    %v1159 = vand.u32 %v709, 4294901760
    %1160 = vmatmul.f32.gmra.mxu0 %v1159
    %v1161 = vpop.f32.mrf.mxu0
    %v1162 = vadd.f32 %v1113, %v1161
    %1163 = vdwg.mxu0
    %v1164 = vadd.f32 %v710, %v1150
    %v1165 = vadd.f32 %v711, %v1154
    %v1166 = vadd.f32 %v712, %v1158
    %v1167 = vadd.f32 %v713, %v1162
    %1168 = vst [vmem:[#allocation2] sm:$0xff] %v1164
    %1169 = vst [vmem:[#allocation2 + $0x8] sm:$0xff] %v1165
    %1170 = vst [vmem:[#allocation2 + $0x10] sm:$0xff] %v1166
    %1171 = vst [vmem:[#allocation2 + $0x18] sm:$0xff] %v1167
    // Predicated region
    $region38: #{tpu_custom_call.1} parent=1 // pred_check
      %p1172 = pneg %p68
    $region39: #{tpu_custom_call.1} parent=1 // pred_check_branch
      %1174 = sbr.rel (%p1172) target = $region41
    $region40: #{tpu_custom_call.1} parent=1 // pred_region
      %v1175 = vld [vmem:[#allocation2] sm:$0xff]
      %v1176 = vld [vmem:[#allocation2 + $0x8] sm:$0xff]
      %v1177 = vld [vmem:[#allocation2 + $0x10] sm:$0xff]
      %v1178 = vld [vmem:[#allocation2 + $0x18] sm:$0xff]
      %v1179 = vld [vmem:[%s4] sm:$0x1]
      %v1181 = vperm.slane %v1179, 0
      %v1183 = vadd.f32 %v1175, %v1181
      %v1184 = vadd.f32 %v1176, %v1181
      %v1185 = vadd.f32 %v1177, %v1181
      %v1186 = vadd.f32 %v1178, %v1181
      %1187 = vst [vmem:[#allocation9] sm:$0xff] %v1183
      %1188 = vst [vmem:[#allocation9 + $0x8] sm:$0xff] %v1184
      %1189 = vst [vmem:[#allocation9 + $0x10] sm:$0xff] %v1185
      %1190 = vst [vmem:[#allocation9 + $0x18] sm:$0xff] %v1186
    $region41: #{tpu_custom_call.1} parent=1 // pred_fallthru
      _
    // Predicated region
    $region42: #{tpu_custom_call.1} parent=1 // pred_check
      _
    $region43: #{tpu_custom_call.1} parent=1 // pred_check_branch
      %1192 = sbr.rel (0) target = $region45
    $region44: #{tpu_custom_call.1} parent=1 // pred_region
      %1194 = vsyncadd [#allocation5], 0
      %s1195 = sshll.u32 [#allocation9], 4
      %s1196 = int_to_ptr.vmem [resolvable:$true] %s1195
      %s1197 = sshll.u32 %s5, 4
      %s1198 = int_to_ptr.hbm [resolvable:$true] %s1197
      %1203 = dma.vmem_to_hbm [thread:$0]  %s1196, 512, %s1198, [#allocation5], 128, 128, 8
    $region45: #{tpu_custom_call.1} parent=1 // pred_fallthru
      _
    // Predicated region
    $region46: #{tpu_custom_call.1} parent=1 // pred_check
      _
    $region47: #{tpu_custom_call.1} parent=1 // pred_check_branch
      %1205 = sbr.rel (0) target = $region49
    $region48: #{tpu_custom_call.1} parent=1 // pred_region
      %1207 = dma.done [#allocation5], 512
    $region49: #{tpu_custom_call.1} parent=1 // pred_fallthru
      _
    %1208 = vsyncpa [#allocation4], 1
    %1209 = vsyncpa [#allocation7], 1
    %1210 = vsyncpa [#allocation5], 1

</llo_original>
